<compile_context>
chip_gen: v7x
topology: tpu7x:2x2x1
jax: 0.10.0
libtpu: 0.0.40
codegen_flags: <defaults>
</compile_context>

<pallas_src>
import math
from functools import partial

import jax
import jax.numpy as jnp
from jax.experimental import pallas as pl
from jax.experimental.pallas import tpu as pltpu

_LANE = 128
_SUBLANE = 8


def _round_up(x, m):
    return ((x + m - 1) // m) * m


def _slp_kernel(x_ref, w1_ref, b1_ref, w2_ref, b2_ref, o_ref):
    """Fused per-tile forward: o = relu(x @ w1 + b1) @ w2 + b2.

    x_ref  : (TB, D_in)   f32   streamed batch tile
    w1_ref : (D_in, HP)   bf16  VMEM-resident (HP = hidden padded to 128)
    b1_ref : (1, HP)      f32   VMEM-resident
    w2_ref : (HP, DP)     bf16  VMEM-resident (DP = out padded to 128)
    b2_ref : (1, DP)      f32   VMEM-resident
    o_ref  : (TB, D_out)  f32   narrow HBM writeback (only real columns)
    """
    d_out = o_ref.shape[-1]

    x = x_ref[...].astype(jnp.bfloat16)                       # (TB, D_in)

    # Layer 1: bf16 MXU matmul, f32 accumulation; bias add + ReLU in f32.
    h = jnp.dot(x, w1_ref[...], preferred_element_type=jnp.float32) + b1_ref[...]
    h = jnp.maximum(h, 0.0)                                    # (TB, HP) f32

    # Layer 2: bf16 MXU matmul, f32 accumulation; bias add in f32.
    y = jnp.dot(h.astype(jnp.bfloat16), w2_ref[...],
                preferred_element_type=jnp.float32) + b2_ref[...]   # (TB, DP) f32

    # Store only the real output columns (narrow masked vst; HBM stays small).
    o_ref[...] = y[:, :d_out].astype(o_ref.dtype)


def prepare_slp_params(w1, b1, w2, b2):
    """One-time weight prep (outside the per-call path).

    Pads hidden/out dims to 128 lanes (zero padding is inert through ReLU and
    the unpadded-column store) and casts the weight matrices to bf16 for the
    MXU.  Biases stay f32.  Weights are stored (in, out), i.e. transposed vs.
    torch's Linear.weight.
    """
    d_in, hidden = w1.shape
    d_out = w2.shape[1]
    hp = _round_up(hidden, _LANE)   # 40 -> 128
    dp = _round_up(d_out, _LANE)    # 4  -> 128
    w1p = jnp.zeros((d_in, hp), jnp.bfloat16).at[:, :hidden].set(
        w1.astype(jnp.bfloat16))
    b1p = jnp.zeros((1, hp), jnp.float32).at[:, :hidden].set(b1.reshape(1, -1))
    w2p = jnp.zeros((hp, dp), jnp.bfloat16).at[:hidden, :d_out].set(
        w2.astype(jnp.bfloat16))
    b2p = jnp.zeros((1, dp), jnp.float32).at[:, :d_out].set(b2.reshape(1, -1))
    return w1p, b1p, w2p, b2p


@partial(jax.jit, static_argnames=("d_out", "tile_b"))
def slp_forward(x, w1p, b1p, w2p, b2p, *, d_out, tile_b=2048):
    """x: (B, D_in) float32 -> (B, d_out) float32."""
    B, d_in = x.shape
    hp = w1p.shape[1]
    dp = w2p.shape[1]

    # Batch tile: multiple of 8 sublanes.  Ragged last tile is handled by
    # Pallas' partial-block masking, so x is never padded/copied here.
    tb = max(_SUBLANE, min(_round_up(tile_b, _SUBLANE), _round_up(B, _SUBLANE)))
    nt = -(-B // tb)
    # v7x: the two TensorCores split the "parallel" batch axis; prefer an even
    # grid length (best effort).  Neutral on v5e/v6e (single TC).
    if nt > 1 and nt % 2 == 1:
        tb = max(_SUBLANE, _round_up(-(-B // (nt + 1)), _SUBLANE))
        nt = -(-B // tb)
    grid = (nt,)

    flops = 2 * B * (d_in * hp + hp * dp)
    bytes_accessed = (x.size * x.dtype.itemsize          # x read
                      + B * d_out * 4                    # narrow output write
                      + w1p.size * 2 + w2p.size * 2      # bf16 weights (one-time)
                      + b1p.size * 4 + b2p.size * 4)     # f32 biases

    out = pl.pallas_call(
        _slp_kernel,
        out_shape=jax.ShapeDtypeStruct((B, d_out), jnp.float32),
        grid=grid,
        in_specs=[
            pl.BlockSpec((tb, d_in), lambda i: (i, 0)),   # streamed x tiles
            pl.BlockSpec(w1p.shape, lambda i: (0, 0)),    # VMEM-resident bf16 W1
            pl.BlockSpec(b1p.shape, lambda i: (0, 0)),    # VMEM-resident f32  b1
            pl.BlockSpec(w2p.shape, lambda i: (0, 0)),    # VMEM-resident bf16 W2
            pl.BlockSpec(b2p.shape, lambda i: (0, 0)),    # VMEM-resident f32  b2
        ],
        out_specs=pl.BlockSpec((tb, d_out), lambda i: (i, 0)),   # narrow writeback
        compiler_params=pltpu.CompilerParams(
            dimension_semantics=("parallel",),
        ),
        cost_estimate=pl.CostEstimate(
            flops=flops, transcendentals=0, bytes_accessed=bytes_accessed),
    )(x, w1p, b1p, w2p, b2p)
    return out


def init_slp_params(key, input_shape, output_shape, hidden_shape=40):
    """torch.nn.Linear default init: U(-1/sqrt(fan_in), 1/sqrt(fan_in))."""
    k1, k2, k3, k4 = jax.random.split(key, 4)
    bound1 = 1.0 / math.sqrt(input_shape)
    bound2 = 1.0 / math.sqrt(hidden_shape)
    # Stored as (in, out) — transpose of PyTorch's (out, in).
    w1 = jax.random.uniform(k1, (input_shape, hidden_shape), jnp.float32, -bound1, bound1)
    b1 = jax.random.uniform(k2, (1, hidden_shape), jnp.float32, -bound1, bound1)
    w2 = jax.random.uniform(k3, (hidden_shape, output_shape), jnp.float32, -bound2, bound2)
    b2 = jax.random.uniform(k4, (1, output_shape), jnp.float32, -bound2, bound2)
    return w1, b1, w2, b2


if __name__ == "__main__":
    key = jax.random.PRNGKey(0)
    kx, kb, kp = jax.random.split(key, 3)

    # SLP(input_shape=(8,), output_shape=4), hidden=40 — matches the torch module.
    # TODO(synk): torch.from_numpy(...).to(device) in forward() is host-side I/O
    # plumbing with no Pallas equivalent; inputs here are already device arrays.
    d_in, d_out, hidden = 8, 4, 40
    w1, b1, w2, b2 = init_slp_params(kp, d_in, d_out, hidden_shape=hidden)
    # One-time weight prep (pad + bf16 cast) hoisted out of the per-call path.
    w1p, b1p, w2p, b2p = prepare_slp_params(w1, b1, w2, b2)

    def ref(xv):
        return jnp.maximum(xv @ w1 + b1, 0.0) @ w2 + b2

    # Small batch (single grid step), like the RL per-observation call.
    x_small = jax.random.normal(kx, (2, d_in), dtype=jnp.float32)
    y_small = slp_forward(x_small, w1p, b1p, w2p, b2p, d_out=d_out)
    jax.block_until_ready(y_small)
    assert y_small.shape == (2, d_out)
    assert jnp.allclose(y_small, ref(x_small), atol=2e-2, rtol=2e-2)  # bf16 MXU inputs

    # Larger, non-multiple-of-tile batch: exercises the pipelined batch grid and
    # the ragged (masked) last block without any wrapper-side padding of x.
    x_big = jax.random.normal(kb, (1030, d_in), dtype=jnp.float32)
    y_big = slp_forward(x_big, w1p, b1p, w2p, b2p, d_out=d_out, tile_b=256)
    jax.block_until_ready(y_big)
    assert y_big.shape == (1030, d_out)
    assert jnp.allclose(y_big, ref(x_big), atol=2e-2, rtol=2e-2)

    print("KERNEL_OK")
</pallas_src>

<mosaic_0001>
module attributes {stable_mosaic.version = 11 : i64} {
  func.func @_slp_kernel(%arg0: i32, %arg1: memref<8x8xf32, #tpu.memory_space<vmem>>, %arg2: memref<8x128xbf16, #tpu.memory_space<vmem>>, %arg3: memref<1x128xf32, #tpu.memory_space<vmem>>, %arg4: memref<128x128xbf16, #tpu.memory_space<vmem>>, %arg5: memref<1x128xf32, #tpu.memory_space<vmem>>, %arg6: memref<8x4xf32, #tpu.memory_space<vmem>>) attributes {dimension_semantics = [#tpu.dimension_semantics<parallel>], iteration_bounds = array<i64: 1>, scalar_prefetch = 0 : i64, scratch_operands = 0 : i64, tpu.core_type = #tpu.core_type<tc>, window_params = [{transform_indices = @transform_0, window_bounds = array<i64: 8, 8>}, {pipeline_mode = #tpu.pipeline_mode<synchronous>, transform_indices = @transform_1, window_bounds = array<i64: 8, 128>}, {pipeline_mode = #tpu.pipeline_mode<synchronous>, transform_indices = @transform_2, window_bounds = array<i64: 1, 128>}, {pipeline_mode = #tpu.pipeline_mode<synchronous>, transform_indices = @transform_3, window_bounds = array<i64: 128, 128>}, {pipeline_mode = #tpu.pipeline_mode<synchronous>, transform_indices = @transform_4, window_bounds = array<i64: 1, 128>}, {transform_indices = @transform_5, window_bounds = array<i64: 8, 4>}]} {
    %c0 = arith.constant 0 : index
    %c0_0 = arith.constant 0 : index
    %0 = vector.load %arg1[%c0, %c0_0] : memref<8x8xf32, #tpu.memory_space<vmem>>, vector<8x8xf32>
    %1 = arith.truncf %0 : vector<8x8xf32> to vector<8x8xbf16>
    %c0_1 = arith.constant 0 : index
    %c0_2 = arith.constant 0 : index
    %2 = vector.load %arg2[%c0_1, %c0_2] : memref<8x128xbf16, #tpu.memory_space<vmem>>, vector<8x128xbf16>
    %cst = arith.constant dense<0.000000e+00> : vector<8x128xf32>
    %3 = tpu.matmul %1, %2, %cst {dimension_numbers = #tpu.dot_dimension_numbers<[1], [0], [0], [1], [0, 0, 1, 1], [], []>} : vector<8x8xbf16>, vector<8x128xbf16>, vector<8x128xf32> -> vector<8x128xf32>
    %c0_3 = arith.constant 0 : index
    %c0_4 = arith.constant 0 : index
    %4 = vector.load %arg3[%c0_3, %c0_4] : memref<1x128xf32, #tpu.memory_space<vmem>>, vector<1x128xf32>
    %5 = vector.broadcast %4 : vector<1x128xf32> to vector<8x128xf32>
    %6 = arith.addf %3, %5 : vector<8x128xf32>
    %cst_5 = arith.constant 0.000000e+00 : f32
    %7 = vector.broadcast %cst_5 : f32 to vector<8x128xf32>
    %8 = arith.maximumf %6, %7 : vector<8x128xf32>
    %9 = arith.truncf %8 : vector<8x128xf32> to vector<8x128xbf16>
    %c0_6 = arith.constant 0 : index
    %c0_7 = arith.constant 0 : index
    %10 = vector.load %arg4[%c0_6, %c0_7] : memref<128x128xbf16, #tpu.memory_space<vmem>>, vector<128x128xbf16>
    %cst_8 = arith.constant dense<0.000000e+00> : vector<8x128xf32>
    %11 = tpu.matmul %9, %10, %cst_8 {dimension_numbers = #tpu.dot_dimension_numbers<[1], [0], [0], [1], [0, 0, 1, 1], [], []>} : vector<8x128xbf16>, vector<128x128xbf16>, vector<8x128xf32> -> vector<8x128xf32>
    %c0_9 = arith.constant 0 : index
    %c0_10 = arith.constant 0 : index
    %12 = vector.load %arg5[%c0_9, %c0_10] : memref<1x128xf32, #tpu.memory_space<vmem>>, vector<1x128xf32>
    %13 = vector.broadcast %12 : vector<1x128xf32> to vector<8x128xf32>
    %14 = arith.addf %11, %13 : vector<8x128xf32>
    %15 = vector.extract_strided_slice %14 {offsets = [0, 0], sizes = [8, 4], strides = [1, 1]} : vector<8x128xf32> to vector<8x4xf32>
    %c0_11 = arith.constant 0 : index
    %c0_12 = arith.constant 0 : index
    %16 = vector.load %arg6[%c0_11, %c0_12] : memref<8x4xf32, #tpu.memory_space<vmem>>, vector<8x4xf32>
    tpu.vector_store %arg6[%c0_11, %c0_12], %15 {strides = array<i32>} : memref<8x4xf32, #tpu.memory_space<vmem>>, vector<8x4xf32>,
    return
  }
  func.func @transform_0(%arg0: i32) -> (i32, i32) {
    %c0_i32 = arith.constant 0 : i32
    %c0_i32_0 = arith.constant 0 : i32
    return %arg0, %c0_i32 : i32, i32
  }
  func.func @transform_1(%arg0: i32) -> (i32, i32) {
    %c0_i32 = arith.constant 0 : i32
    %c0_i32_0 = arith.constant 0 : i32
    %c0_i32_1 = arith.constant 0 : i32
    return %c0_i32, %c0_i32_0 : i32, i32
  }
  func.func @transform_2(%arg0: i32) -> (i32, i32) {
    %c0_i32 = arith.constant 0 : i32
    %c0_i32_0 = arith.constant 0 : i32
    %c0_i32_1 = arith.constant 0 : i32
    return %c0_i32, %c0_i32_0 : i32, i32
  }
  func.func @transform_3(%arg0: i32) -> (i32, i32) {
    %c0_i32 = arith.constant 0 : i32
    %c0_i32_0 = arith.constant 0 : i32
    %c0_i32_1 = arith.constant 0 : i32
    return %c0_i32, %c0_i32_0 : i32, i32
  }
  func.func @transform_4(%arg0: i32) -> (i32, i32) {
    %c0_i32 = arith.constant 0 : i32
    %c0_i32_0 = arith.constant 0 : i32
    %c0_i32_1 = arith.constant 0 : i32
    return %c0_i32, %c0_i32_0 : i32, i32
  }
  func.func @transform_5(%arg0: i32) -> (i32, i32) {
    %c0_i32 = arith.constant 0 : i32
    %c0_i32_0 = arith.constant 0 : i32
    return %arg0, %c0_i32 : i32, i32
  }
}

</mosaic_0001>

<llo_original>
// kernel: slp_forward.1
$region0: #{slp_forward.1}
  #allocation0 [shape = 'u32[]', space=smem, size = 0x4, offset = 0x4, fixed_abs, tag = 'smem constant byte address 0x4 - core index']
  #allocation1 [shape = 'u32[144,128]{1,0:T(1,128)}', space=vmem, size = 0x12000, scoped, tag = 'internal scratch']
  %s0 = inlined_call_operand.hbm [shape: f32[2,8], index: 0, kind: input, shape index: {}]
  %s1 = inlined_call_operand.hbm [shape: bf16[8,128], index: 1, kind: input, shape index: {}]
  %s2 = inlined_call_operand.vmem [shape: f32[1,128], index: 2, kind: input, shape index: {}]
  %s3 = inlined_call_operand.hbm [shape: bf16[128,128], index: 3, kind: input, shape index: {}]
  %s4 = inlined_call_operand.vmem [shape: f32[1,128], index: 4, kind: input, shape index: {}]
  %s5 = inlined_call_operand.hbm [shape: f32[2,4], index: 5, kind: output, shape index: {}]
  %s6 = sld [smem:[#allocation0]]
  $region42: #{slp_forward.1} parent=0
    _
  %s8 = ssub.s32 1, %s6
  %s9 = scalar_select 0, %s8, %s6
  $region1: #{slp_forward.1} parent=0
    #allocation2 [shape = 'u8[4096]{0}', space=vmem, size = 0x1000, scoped, tag = 'input window, operand 0, single buffered']
    #allocation3 [shape = 's32[1]{0}', space=sflag, size = 0x4, scoped, tag = 'scoped memory for slp_forward.1']
    #allocation4 [shape = 's32[1]{0}', space=sflag, size = 0x4, scoped, tag = 'scoped memory for slp_forward.1']
    #allocation5 [shape = 'u8[2048]{0}', space=vmem, size = 0x800, scoped, tag = 'input window, operand 1, single buffered']
    #allocation6 [shape = 's32[1]{0}', space=sflag, size = 0x4, scoped, tag = 'scoped memory for slp_forward.1']
    #allocation7 [shape = 'u8[32768]{0}', space=vmem, size = 0x8000, scoped, tag = 'input window, operand 3, single buffered']
    #allocation8 [shape = 'u8[4096]{0}', space=vmem, size = 0x1000, scoped, tag = 'output window, operand 0, single buffered']
    %10 = vsyncpa [#allocation3], 0
    %11 = vsyncpa [#allocation6], 0
    %12 = vsyncpa [#allocation4], 0
    // Predicated region
    $region2: #{slp_forward.1} parent=1 // pred_check
      _
    $region3: #{slp_forward.1} parent=1 // pred_check_branch
      %14 = sbr.rel (0) target = $region5
    $region4: #{slp_forward.1} parent=1 // pred_region
      %s16 = ssub.s32 128, 32
      %17 = vsyncadd [#allocation3], %s16
      %s18 = sshll.u32 [#allocation2], 4
      %s19 = int_to_ptr.vmem [resolvable:$true] %s18
      %24 = dma.hbm_to_vmem [thread:$0]  %s0, 32, %s19, [#allocation3], 32, 32, 2
    $region5: #{slp_forward.1} parent=1 // pred_fallthru
      _
    // Predicated region
    $region6: #{slp_forward.1} parent=1 // pred_check
      _
    $region7: #{slp_forward.1} parent=1 // pred_check_branch
      %26 = sbr.rel (0) target = $region9
    $region8: #{slp_forward.1} parent=1 // pred_region
      %s28 = ssub.s32 64, 64
      %29 = vsyncadd [#allocation6], %s28
      %s31 = sshll.u32 [#allocation5], 4
      %s32 = int_to_ptr.vmem [resolvable:$true] %s31
      %34 = dma.hbm_to_vmem [thread:$0]  %s1, 64, %s32, [#allocation6]
    $region9: #{slp_forward.1} parent=1 // pred_fallthru
      _
    // Predicated region
    $region10: #{slp_forward.1} parent=1 // pred_check
      _
    $region11: #{slp_forward.1} parent=1 // pred_check_branch
      %36 = sbr.rel (0) target = $region13
    $region12: #{slp_forward.1} parent=1 // pred_region
      _
    $region13: #{slp_forward.1} parent=1 // pred_fallthru
      _
    // Predicated region
    $region14: #{slp_forward.1} parent=1 // pred_check
      _
    $region15: #{slp_forward.1} parent=1 // pred_check_branch
      %38 = sbr.rel (0) target = $region17
    $region16: #{slp_forward.1} parent=1 // pred_region
      %s40 = ssub.s32 1024, 1024
      %41 = vsyncadd [#allocation6], %s40
      %s42 = sshll.u32 [#allocation7], 4
      %s43 = int_to_ptr.vmem [resolvable:$true] %s42
      %48 = dma.hbm_to_vmem [thread:$0]  %s3, 1024, %s43, [#allocation6], 64, 64, 4
    $region17: #{slp_forward.1} parent=1 // pred_fallthru
      _
    // Predicated region
    $region18: #{slp_forward.1} parent=1 // pred_check
      _
    $region19: #{slp_forward.1} parent=1 // pred_check_branch
      %50 = sbr.rel (0) target = $region21
    $region20: #{slp_forward.1} parent=1 // pred_region
      _
    $region21: #{slp_forward.1} parent=1 // pred_fallthru
      _
    // Predicated region
    $region22: #{slp_forward.1} parent=1 // pred_check
      _
    $region23: #{slp_forward.1} parent=1 // pred_check_branch
      %52 = sbr.rel (0) target = $region25
    $region24: #{slp_forward.1} parent=1 // pred_region
      %53 = dma.done [#allocation3], 128
    $region25: #{slp_forward.1} parent=1 // pred_fallthru
      _
    // Predicated region
    $region26: #{slp_forward.1} parent=1 // pred_check
      _
    $region27: #{slp_forward.1} parent=1 // pred_check_branch
      %55 = sbr.rel (0) target = $region29
    $region28: #{slp_forward.1} parent=1 // pred_region
      %56 = dma.done [#allocation6], 64
    $region29: #{slp_forward.1} parent=1 // pred_fallthru
      _
    // Predicated region
    $region30: #{slp_forward.1} parent=1 // pred_check
      _
    $region31: #{slp_forward.1} parent=1 // pred_check_branch
      %58 = sbr.rel (0) target = $region33
    $region32: #{slp_forward.1} parent=1 // pred_region
      %59 = dma.done [#allocation6], 1024
    $region33: #{slp_forward.1} parent=1 // pred_fallthru
      _
    %v61 = vld [vmem:[#allocation2] sm:$0xff]
    %v62 = vpack.c.bf16 %v61, %v61
    %v63 = vld [vmem:[#allocation5] sm:$0xf]
    %v64 = vld [vmem:[%s2] sm:$0x1]
    %v66 = vlaneseq
    %v67 = vshrl.u32 %v66, 7
    %v68 = vsub.s32 0, %v67
    %v69 = vrot.slane %v64, %v68
    %vm71 = vcmask 64512
    %v73 = vsel %vm71, %v62, 0
    %vm75 = vcmask 1043456
    %v77 = vsel %vm75, %v63, 0
    %79 = vmatprep.subr.bf16.mxu0 0
    %80 = vmatpush1.bf16.msra.mxu0 %v77
    %81 = vmatprep.subr.bf16.mxu0 0
    %82 = vmatpush1.bf16.msra.mxu0 0
    %83 = vmatprep.subr.bf16.mxu0 0
    %84 = vmatpush1.bf16.msra.mxu0 0
    %85 = vmatprep.subr.bf16.mxu0 0
    %86 = vmatpush1.bf16.msra.mxu0 0
    %87 = vmatprep.subr.bf16.mxu0 0
    %88 = vmatpush1.bf16.msra.mxu0 0
    %89 = vmatprep.subr.bf16.mxu0 0
    %90 = vmatpush1.bf16.msra.mxu0 0
    %91 = vmatprep.subr.bf16.mxu0 0
    %92 = vmatpush1.bf16.msra.mxu0 0
    %93 = vmatprep.subr.bf16.mxu0 0
    %94 = vmatpush1.bf16.msra.mxu0 0
    %95 = vmatprep.subr.bf16.mxu0 0
    %96 = vmatpush1.bf16.msra.mxu0 0
    %97 = vmatprep.subr.bf16.mxu0 0
    %98 = vmatpush1.bf16.msra.mxu0 0
    %99 = vmatprep.subr.bf16.mxu0 0
    %100 = vmatpush1.bf16.msra.mxu0 0
    %101 = vmatprep.subr.bf16.mxu0 0
    %102 = vmatpush1.bf16.msra.mxu0 0
    %103 = vmatprep.subr.bf16.mxu0 0
    %104 = vmatpush1.bf16.msra.mxu0 0
    %105 = vmatprep.subr.bf16.mxu0 0
    %106 = vmatpush1.bf16.msra.mxu0 0
    %107 = vmatprep.subr.bf16.mxu0 0
    %108 = vmatpush1.bf16.msra.mxu0 0
    %109 = vmatprep.subr.bf16.mxu0 0
    %110 = vmatpush1.bf16.msra.mxu0 0
    %111 = vmatprep.mubr.bf16.mxu0 0
    %112 = vmatmul.mubr.bf16.gmra.mrb[0].mxu0 %v73
    %v113 = vpop.f32.mrb[0].mxu0
    %v114 = vadd.f32 %v69, %v113
    %v115 = vpop.f32.mrb[0].mxu0
    %v116 = vpop.f32.mrb[0].mxu0
    %v117 = vpop.f32.mrb[0].mxu0
    %118 = vdwg.mxu0
    %v119 = vmax.f32 %v114, 0.0
    %v120 = vpack.c.bf16 %v119, %v119
    %v121 = vld [vmem:[#allocation7] sm:$0xf]
    %v122 = vld [vmem:[#allocation7 + $0x4] sm:$0xf]
    %v123 = vld [vmem:[#allocation7 + $0x8] sm:$0xf]
    %v124 = vld [vmem:[#allocation7 + $0xc] sm:$0xf]
    %v125 = vld [vmem:[#allocation7 + $0x10] sm:$0xf]
    %v126 = vld [vmem:[#allocation7 + $0x14] sm:$0xf]
    %v127 = vld [vmem:[#allocation7 + $0x18] sm:$0xf]
    %v128 = vld [vmem:[#allocation7 + $0x1c] sm:$0xf]
    %v129 = vld [vmem:[#allocation7 + $0x20] sm:$0xf]
    %v130 = vld [vmem:[#allocation7 + $0x24] sm:$0xf]
    %v131 = vld [vmem:[#allocation7 + $0x28] sm:$0xf]
    %v132 = vld [vmem:[#allocation7 + $0x2c] sm:$0xf]
    %v133 = vld [vmem:[#allocation7 + $0x30] sm:$0xf]
    %v134 = vld [vmem:[#allocation7 + $0x34] sm:$0xf]
    %v135 = vld [vmem:[#allocation7 + $0x38] sm:$0xf]
    %v136 = vld [vmem:[#allocation7 + $0x3c] sm:$0xf]
    %v137 = vld [vmem:[%s4] sm:$0x1]
    %v139 = vlaneseq
    %v140 = vshrl.u32 %v139, 7
    %v141 = vsub.s32 0, %v140
    %v142 = vrot.slane %v137, %v141
    %v160 = vunpack.c.l.b16 %v121
    %v161 = vunpack.c.l.b16 %v122
    %v162 = vunpack.c.l.b16 %v123
    %v163 = vunpack.c.l.b16 %v124
    %v164 = vunpack.c.l.b16 %v125
    %v165 = vunpack.c.l.b16 %v126
    %v166 = vunpack.c.l.b16 %v127
    %v167 = vunpack.c.l.b16 %v128
    %v168 = vunpack.c.l.b16 %v129
    %v169 = vunpack.c.l.b16 %v130
    %v170 = vunpack.c.l.b16 %v131
    %v171 = vunpack.c.l.b16 %v132
    %v172 = vunpack.c.l.b16 %v133
    %v173 = vunpack.c.l.b16 %v134
    %v174 = vunpack.c.l.b16 %v135
    %v175 = vunpack.c.l.b16 %v136
    %v176 = vpack.c.b16 %v161, %v160
    %v177 = vpack.c.b16 %v163, %v162
    %v178 = vpack.c.b16 %v165, %v164
    %v179 = vpack.c.b16 %v167, %v166
    %v180 = vpack.c.b16 %v169, %v168
    %v181 = vpack.c.b16 %v171, %v170
    %v182 = vpack.c.b16 %v173, %v172
    %v183 = vpack.c.b16 %v175, %v174
    %192 = vmatprep.subr.bf16.mxu0 0
    %193 = vmatpush1.bf16.msra.mxu0 %v176
    %194 = vmatprep.subr.bf16.mxu0 0
    %195 = vmatpush1.bf16.msra.mxu0 %v177
    %196 = vmatprep.subr.bf16.mxu0 0
    %197 = vmatpush1.bf16.msra.mxu0 %v178
    %198 = vmatprep.subr.bf16.mxu0 0
    %199 = vmatpush1.bf16.msra.mxu0 %v179
    %200 = vmatprep.subr.bf16.mxu0 0
    %201 = vmatpush1.bf16.msra.mxu0 %v180
    %202 = vmatprep.subr.bf16.mxu0 0
    %203 = vmatpush1.bf16.msra.mxu0 %v181
    %204 = vmatprep.subr.bf16.mxu0 0
    %205 = vmatpush1.bf16.msra.mxu0 %v182
    %206 = vmatprep.subr.bf16.mxu0 0
    %207 = vmatpush1.bf16.msra.mxu0 %v183
    %208 = vmatprep.subr.bf16.mxu0 0
    %209 = vmatpush1.bf16.msra.mxu0 0
    %210 = vmatprep.subr.bf16.mxu0 0
    %211 = vmatpush1.bf16.msra.mxu0 0
    %212 = vmatprep.subr.bf16.mxu0 0
    %213 = vmatpush1.bf16.msra.mxu0 0
    %214 = vmatprep.subr.bf16.mxu0 0
    %215 = vmatpush1.bf16.msra.mxu0 0
    %216 = vmatprep.subr.bf16.mxu0 0
    %217 = vmatpush1.bf16.msra.mxu0 0
    %218 = vmatprep.subr.bf16.mxu0 0
    %219 = vmatpush1.bf16.msra.mxu0 0
    %220 = vmatprep.subr.bf16.mxu0 0
    %221 = vmatpush1.bf16.msra.mxu0 0
    %222 = vmatprep.subr.bf16.mxu0 0
    %223 = vmatpush1.bf16.msra.mxu0 0
    %224 = vmatprep.mubr.bf16.mxu0 0
    %225 = vmatmul.mubr.bf16.gmra.mrb[0].mxu0 %v120
    %v226 = vpop.f32.mrb[0].mxu0
    %v227 = vadd.f32 %v142, %v226
    %v228 = vpop.f32.mrb[0].mxu0
    %v229 = vpop.f32.mrb[0].mxu0
    %v230 = vpop.f32.mrb[0].mxu0
    %231 = vdwg.mxu0
    %vm232 = vcmask 31744
    %233 = vst.msk [vmem:[#allocation8] sm:$0xff] %vm232, %v227
    // Predicated region
    $region34: #{slp_forward.1} parent=1 // pred_check
      _
    $region35: #{slp_forward.1} parent=1 // pred_check_branch
      %235 = sbr.rel (0) target = $region37
    $region36: #{slp_forward.1} parent=1 // pred_region
      %s237 = ssub.s32 128, 32
      %238 = vsyncadd [#allocation4], %s237
      %s239 = sshll.u32 [#allocation8], 4
      %s240 = int_to_ptr.vmem [resolvable:$true] %s239
      %245 = dma.vmem_to_hbm [thread:$0]  %s240, 32, %s5, [#allocation4], 32, 32, 2
    $region37: #{slp_forward.1} parent=1 // pred_fallthru
      _
    // Predicated region
    $region38: #{slp_forward.1} parent=1 // pred_check
      _
    $region39: #{slp_forward.1} parent=1 // pred_check_branch
      %247 = sbr.rel (0) target = $region41
    $region40: #{slp_forward.1} parent=1 // pred_region
      %248 = dma.done [#allocation4], 128
    $region41: #{slp_forward.1} parent=1 // pred_fallthru
      _
    %249 = vsyncpa [#allocation3], 1
    %250 = vsyncpa [#allocation6], 1
    %251 = vsyncpa [#allocation4], 1

</llo_original>
